<compile_context>
chip_gen: v5e
topology: v5e:2x2
jax: 0.10.0
libtpu: 0.0.40
codegen_flags: <defaults>
</compile_context>

<pallas_src>
import functools

import jax
import jax.numpy as jnp
from jax.experimental import pallas as pl
from jax.experimental.pallas import tpu as pltpu

KERNEL_SIZE = 3
STRIDE = 1  # stride=1 -> output[h, w] = max over x[h:h+3, w:w+3]


def _maxpool3x3_kernel(x_ref, o_ref, *, w: int):
    # x_ref / o_ref: (tile_planes, H*W) in VMEM. Lane axis holds a full plane.
    x = x_ref[...]
    # Row (H-direction) maxima: lane rotates by W and 2W (XLU), VPU max.
    r = jnp.maximum(x, pltpu.roll(x, w, axis=1))
    r = jnp.maximum(r, pltpu.roll(x, 2 * w, axis=1))
    # Column (W-direction) maxima: lane rotates by 1 and 2.
    c = jnp.maximum(r, pltpu.roll(r, 1, axis=1))
    c = jnp.maximum(c, pltpu.roll(r, 2, axis=1))
    # c[h*W + w] == max over x[(h-2..h)*W + (w-2..w)]  (bottom-right aligned).
    o_ref[...] = c


def _pick_plane_tile(nc: int, hw: int, itemsize: int) -> int:
    """Largest multiple-of-8 divisor of `nc` keeping an input block <= ~2 MiB."""
    if nc % 8 != 0:
        return nc  # full-extent block is always legal under the (8,128) rule
    cap = max(8, (2 * 1024 * 1024) // max(1, hw * itemsize))
    cap -= cap % 8
    tile = min(nc, max(8, cap))
    while tile > 8 and nc % tile != 0:
        tile -= 8
    return tile


def maxpool2d(x):
    """MaxPool2d(kernel_size=3, stride=1, padding=0) over an NCHW input."""
    n, c, h, w = x.shape
    assert h >= KERNEL_SIZE and w >= KERNEL_SIZE
    nc = n * c
    hw = h * w

    x_flat = x.reshape(nc, hw)
    tile = _pick_plane_tile(nc, hw, x.dtype.itemsize)
    grid = (nc // tile,)

    out_flat = pl.pallas_call(
        functools.partial(_maxpool3x3_kernel, w=w),
        out_shape=jax.ShapeDtypeStruct((nc, hw), x.dtype),
        grid=grid,
        in_specs=[pl.BlockSpec((tile, hw), lambda i: (i, 0))],
        out_specs=pl.BlockSpec((tile, hw), lambda i: (i, 0)),
        compiler_params=pltpu.CompilerParams(
            dimension_semantics=("parallel",)),
    )(x_flat)

    # Valid outputs live at rows/cols [2:] of the full H x W result.
    k = KERNEL_SIZE - 1
    return out_flat.reshape(n, c, h, w)[:, :, k:, k:]


def reference_maxpool2d(x):
    # Pure-JAX reference (init from data, so it is dtype-agnostic).
    _, _, h, w = x.shape
    ho, wo = h - (KERNEL_SIZE - 1), w - (KERNEL_SIZE - 1)
    out = x[:, :, 0:ho, 0:wo]
    for kh in range(KERNEL_SIZE):
        for kw in range(KERNEL_SIZE):
            out = jnp.maximum(out, x[:, :, kh:kh + ho, kw:kw + wo])
    return out


if __name__ == "__main__":
    key = jax.random.PRNGKey(0)
    # batch=2, channels=4, spatial=16 -> output spatial 14
    x = jax.random.normal(key, (2, 4, 16, 16), dtype=jnp.float32)

    y = jax.block_until_ready(maxpool2d(x))
    y_ref = reference_maxpool2d(x)

    assert y.shape == (2, 4, 14, 14), y.shape
    assert jnp.allclose(y, y_ref), "mismatch vs reference"

    print("KERNEL_OK")
</pallas_src>

<mosaic_0001>
module attributes {stable_mosaic.version = 11 : i64} {
  func.func @_maxpool3x3_kernel(%arg0: i32, %arg1: memref<8x256xf32, #tpu.memory_space<vmem>>, %arg2: memref<8x256xf32, #tpu.memory_space<vmem>>) attributes {dimension_semantics = [#tpu.dimension_semantics<parallel>], iteration_bounds = array<i64: 1>, scalar_prefetch = 0 : i64, scratch_operands = 0 : i64, tpu.core_type = #tpu.core_type<tc>, window_params = [{transform_indices = @transform_0, window_bounds = array<i64: 8, 256>}, {transform_indices = @transform_1, window_bounds = array<i64: 8, 256>}]} {
    %c0 = arith.constant 0 : index
    %c0_0 = arith.constant 0 : index
    %0 = vector.load %arg1[%c0, %c0_0] : memref<8x256xf32, #tpu.memory_space<vmem>>, vector<8x256xf32>
    %c16_i32 = arith.constant 16 : i32
    %1 = tpu.dynamic_rotate %0 by %c16_i32 dim 1 : vector<8x256xf32>, i32 -> vector<8x256xf32>
    %2 = arith.maximumf %0, %1 : vector<8x256xf32>
    %c32_i32 = arith.constant 32 : i32
    %3 = tpu.dynamic_rotate %0 by %c32_i32 dim 1 : vector<8x256xf32>, i32 -> vector<8x256xf32>
    %4 = arith.maximumf %2, %3 : vector<8x256xf32>
    %c1_i32 = arith.constant 1 : i32
    %5 = tpu.dynamic_rotate %4 by %c1_i32 dim 1 : vector<8x256xf32>, i32 -> vector<8x256xf32>
    %6 = arith.maximumf %4, %5 : vector<8x256xf32>
    %c2_i32 = arith.constant 2 : i32
    %7 = tpu.dynamic_rotate %4 by %c2_i32 dim 1 : vector<8x256xf32>, i32 -> vector<8x256xf32>
    %8 = arith.maximumf %6, %7 : vector<8x256xf32>
    %c0_1 = arith.constant 0 : index
    %c0_2 = arith.constant 0 : index
    %9 = vector.load %arg2[%c0_1, %c0_2] : memref<8x256xf32, #tpu.memory_space<vmem>>, vector<8x256xf32>
    tpu.vector_store %arg2[%c0_1, %c0_2], %8 {strides = array<i32>} : memref<8x256xf32, #tpu.memory_space<vmem>>, vector<8x256xf32>,
    return
  }
  func.func @transform_0(%arg0: i32) -> (i32, i32) {
    %c0_i32 = arith.constant 0 : i32
    %c0_i32_0 = arith.constant 0 : i32
    return %arg0, %c0_i32 : i32, i32
  }
  func.func @transform_1(%arg0: i32) -> (i32, i32) {
    %c0_i32 = arith.constant 0 : i32
    %c0_i32_0 = arith.constant 0 : i32
    return %arg0, %c0_i32 : i32, i32
  }
}

</mosaic_0001>

<llo_original>
// kernel: tpu_custom_call.1
$region0: #{tpu_custom_call.1}
  #allocation0 [shape = 'u32[]', space=smem, size = 0x4, offset = 0x4, fixed_abs, tag = 'smem constant byte address 0x4 - core index']
  #allocation1 [shape = 'u32[72,128]{1,0:T(1,128)}', space=vmem, size = 0x9000, scoped, tag = 'internal scratch']
  %s0 = inlined_call_operand.hbm [shape: f32[8,256], index: 0, kind: input, shape index: {}]
  %s1 = inlined_call_operand.hbm [shape: f32[8,256], index: 1, kind: output, shape index: {}]
  %s2 = sld [smem:[#allocation0]]
  $region18: #{tpu_custom_call.1} parent=0
    _
  %s4 = ssub.s32 1, %s2
  %s5 = scalar_select 0, %s4, %s2
  $region1: #{tpu_custom_call.1} parent=0
    #allocation2 [shape = 'u8[8192]{0}', space=vmem, size = 0x2000, scoped, tag = 'input window, operand 0, single buffered']
    #allocation3 [shape = 's32[1]{0}', space=sflag, size = 0x4, scoped, tag = 'scoped memory for tpu_custom_call.1']
    #allocation4 [shape = 's32[1]{0}', space=sflag, size = 0x4, scoped, tag = 'scoped memory for tpu_custom_call.1']
    #allocation5 [shape = 'u8[8192]{0}', space=vmem, size = 0x2000, scoped, tag = 'output window, operand 0, single buffered']
    %6 = vsyncpa [#allocation3], 0
    %7 = vsyncpa [#allocation4], 0
    // Predicated region
    $region2: #{tpu_custom_call.1} parent=1 // pred_check
      _
    $region3: #{tpu_custom_call.1} parent=1 // pred_check_branch
      %9 = sbr.rel (0) target = $region5
    $region4: #{tpu_custom_call.1} parent=1 // pred_region
      %11 = vsyncadd [#allocation3], 0
      %s13 = sshll.u32 %s0, 4
      %s14 = int_to_ptr.hbm [resolvable:$true] %s13
      %s15 = sshll.u32 [#allocation2], 4
      %s16 = int_to_ptr.vmem [resolvable:$true] %s15
      %18 = dma.hbm_to_vmem [thread:$0]  %s14, 256, %s16, [#allocation3]
    $region5: #{tpu_custom_call.1} parent=1 // pred_fallthru
      _
    // Predicated region
    $region6: #{tpu_custom_call.1} parent=1 // pred_check
      _
    $region7: #{tpu_custom_call.1} parent=1 // pred_check_branch
      %20 = sbr.rel (0) target = $region9
    $region8: #{tpu_custom_call.1} parent=1 // pred_region
      %22 = dma.done [#allocation3], 256
    $region9: #{tpu_custom_call.1} parent=1 // pred_fallthru
      _
    %v23 = vld [vmem:[#allocation2] sm:$0xff]
    %v24 = vld [vmem:[#allocation2 + $0x8] sm:$0xff]
    %25 = vrot.lane.b32.xlu0 %v23, 16
    %v26 = vpop.permute.xlu0 %25
    %27 = vrot.lane.b32.xlu0 %v24, 16
    %v28 = vpop.permute.xlu0 %27
    %v29 = vlaneseq
    %v30 = vand.u32 %v29, 127
    %vm31 = vcmp.lt.s32.totalorder %v30, 16
    %v32 = vsel %vm31, %v26, %v28
    %v33 = vsel %vm31, %v28, %v26
    %v34 = vmax.f32 %v23, %v33
    %v35 = vmax.f32 %v24, %v32
    %36 = vrot.lane.b32.xlu0 %v23, 32
    %v37 = vpop.permute.xlu0 %36
    %38 = vrot.lane.b32.xlu0 %v24, 32
    %v39 = vpop.permute.xlu0 %38
    %vm40 = vcmp.lt.s32.totalorder %v30, 32
    %v41 = vsel %vm40, %v37, %v39
    %v42 = vsel %vm40, %v39, %v37
    %v43 = vmax.f32 %v34, %v42
    %v44 = vmax.f32 %v35, %v41
    %45 = vrot.lane.b32.xlu0 %v43, 1
    %v46 = vpop.permute.xlu0 %45
    %47 = vrot.lane.b32.xlu0 %v44, 1
    %v48 = vpop.permute.xlu0 %47
    %vm49 = vcmp.lt.s32.totalorder %v30, 1
    %v50 = vsel %vm49, %v46, %v48
    %v51 = vsel %vm49, %v48, %v46
    %v52 = vmax.f32 %v43, %v51
    %v53 = vmax.f32 %v44, %v50
    %54 = vrot.lane.b32.xlu0 %v43, 2
    %v55 = vpop.permute.xlu0 %54
    %56 = vrot.lane.b32.xlu0 %v44, 2
    %v57 = vpop.permute.xlu0 %56
    %vm58 = vcmp.lt.s32.totalorder %v30, 2
    %v59 = vsel %vm58, %v55, %v57
    %v60 = vsel %vm58, %v57, %v55
    %v61 = vmax.f32 %v52, %v60
    %v62 = vmax.f32 %v53, %v59
    %63 = vst [vmem:[#allocation5] sm:$0xff] %v61
    %64 = vst [vmem:[#allocation5 + $0x8] sm:$0xff] %v62
    // Predicated region
    $region10: #{tpu_custom_call.1} parent=1 // pred_check
      _
    $region11: #{tpu_custom_call.1} parent=1 // pred_check_branch
      %66 = sbr.rel (0) target = $region13
    $region12: #{tpu_custom_call.1} parent=1 // pred_region
      %68 = vsyncadd [#allocation4], 0
      %s70 = sshll.u32 [#allocation5], 4
      %s71 = int_to_ptr.vmem [resolvable:$true] %s70
      %s72 = sshll.u32 %s1, 4
      %s73 = int_to_ptr.hbm [resolvable:$true] %s72
      %75 = dma.vmem_to_hbm [thread:$0]  %s71, 256, %s73, [#allocation4]
    $region13: #{tpu_custom_call.1} parent=1 // pred_fallthru
      _
    // Predicated region
    $region14: #{tpu_custom_call.1} parent=1 // pred_check
      _
    $region15: #{tpu_custom_call.1} parent=1 // pred_check_branch
      %77 = sbr.rel (0) target = $region17
    $region16: #{tpu_custom_call.1} parent=1 // pred_region
      %79 = dma.done [#allocation4], 256
    $region17: #{tpu_custom_call.1} parent=1 // pred_fallthru
      _
    %80 = vsyncpa [#allocation3], 1
    %81 = vsyncpa [#allocation4], 1

</llo_original>
